<compile_context>
chip_gen: v7x
topology: tpu7x:2x2x1
jax: 0.10.0
libtpu: 0.0.40
codegen_flags: <defaults>
</compile_context>

<pallas_src>
import functools

import jax
import jax.numpy as jnp
import numpy as np
from jax import lax
from jax.experimental import pallas as pl
from jax.experimental.pallas import tpu as pltpu

EPS = 1e-5
COMPUTE_DTYPE = jnp.bfloat16   # MXU input dtype (accumulation stays f32)


def _round_up(x, m):
    return (x + m - 1) // m * m


# ----------------------- phase 1: conv GEMM + BN stats ---------------------- #
def _conv_stats_kernel(p_ref, w_ref, conv_ref, sum_ref, sq_ref):
    i = pl.program_id(0)
    # (TM, Kp) @ (Kp, Coutp) on the MXU, f32 accumulation.
    acc = jnp.dot(p_ref[...], w_ref[...], preferred_element_type=jnp.float32)
    conv_ref[...] = acc

    tile_sum = jnp.sum(acc, axis=0, keepdims=True)        # (1, Coutp)
    tile_sq = jnp.sum(acc * acc, axis=0, keepdims=True)   # (1, Coutp)

    @pl.when(i == 0)
    def _init():
        sum_ref[...] = tile_sum
        sq_ref[...] = tile_sq

    @pl.when(i > 0)
    def _accumulate():
        sum_ref[...] = sum_ref[...] + tile_sum
        sq_ref[...] = sq_ref[...] + tile_sq


# --------------------- phase 2: folded BN affine + ReLU --------------------- #
def _bn_relu_kernel(conv_ref, s_ref, t_ref, o_ref):
    y = conv_ref[...] * s_ref[...] + t_ref[...]           # single FMA per element
    o_ref[...] = jnp.maximum(y, 0.0).astype(o_ref.dtype)


# ------------------------------- glue (JAX) --------------------------------- #
def _im2col_nhwc(x_nhwc, kh, kw, stride, padding, dilation):
    """Extract conv patches; returns (N*Ho*Wo, kh*kw*Cin) and (N, Ho, Wo)."""
    xp = jnp.pad(x_nhwc, ((0, 0), (padding, padding), (padding, padding), (0, 0)))
    n, hp, wp, cin = xp.shape
    ho = (hp - (kh - 1) * dilation - 1) // stride + 1
    wo = (wp - (kw - 1) * dilation - 1) // stride + 1
    cols = []
    for i in range(kh):
        for j in range(kw):
            sl = xp[:,
                    i * dilation: i * dilation + (ho - 1) * stride + 1: stride,
                    j * dilation: j * dilation + (wo - 1) * stride + 1: stride,
                    :]
            cols.append(sl)                                # (N, Ho, Wo, Cin)
    patches = jnp.stack(cols, axis=3)                      # (N, Ho, Wo, kh*kw, Cin)
    return patches.reshape(n * ho * wo, kh * kw * cin), (n, ho, wo)


@functools.partial(jax.jit,
                   static_argnames=("stride", "padding", "dilation", "groups", "block_m"))
def bn_conv2d_relu(x_nchw, weight_oihw, gamma, beta, *, stride=1, padding=1,
                   dilation=1, groups=1, block_m=512):
    """Forward of BN_Conv2d: relu(batchnorm(conv2d(x))). Returns NCHW."""
    assert groups == 1  # TODO(synk): grouped convolution not implemented (module default groups=1)
    cout, cin, kh, kw = weight_oihw.shape

    x_nhwc = jnp.transpose(x_nchw, (0, 2, 3, 1)).astype(COMPUTE_DTYPE)
    # TODO(synk): implicit GEMM (slicing the padded NHWC input per (kh,kw) inside
    # the kernel) would avoid the KH*KW im2col HBM inflation; kept as bf16 im2col here.
    patches, (n, ho, wo) = _im2col_nhwc(x_nhwc, kh, kw, stride, padding, dilation)
    m, k = patches.shape

    # Alignment: lane-dense channels, sublane-aligned K (bf16), block-aligned M.
    coutp = _round_up(cout, 128)
    kp = _round_up(k, 16)
    tm = min(block_m, _round_up(m, 8))       # tile rows (multiple of 8)
    mp = _round_up(m, tm)
    num_tiles = mp // tm

    patches = jnp.pad(patches, ((0, mp - m), (0, kp - k)))            # zero rows/cols
    w_mat = jnp.transpose(weight_oihw, (2, 3, 1, 0)).reshape(k, cout)  # (kh,kw,cin) row order
    w_mat = jnp.pad(w_mat, ((0, kp - k), (0, coutp - cout))).astype(COMPUTE_DTYPE)

    # ---- phase 1: tiled GEMM + cross-tile sum / sum-of-squares --------------
    conv_flat, csum, csq = pl.pallas_call(
        _conv_stats_kernel,
        out_shape=(jax.ShapeDtypeStruct((mp, coutp), jnp.float32),
                   jax.ShapeDtypeStruct((1, coutp), jnp.float32),
                   jax.ShapeDtypeStruct((1, coutp), jnp.float32)),
        grid=(num_tiles,),
        in_specs=[pl.BlockSpec((tm, kp), lambda i: (i, 0)),      # patches tile
                  pl.BlockSpec((kp, coutp), lambda i: (0, 0))],  # weights (resident)
        out_specs=(pl.BlockSpec((tm, coutp), lambda i: (i, 0)),  # raw conv tile
                   pl.BlockSpec((1, coutp), lambda i: (0, 0)),   # sum accumulator
                   pl.BlockSpec((1, coutp), lambda i: (0, 0))),  # sumsq accumulator
        compiler_params=pltpu.CompilerParams(dimension_semantics=("arbitrary",)),
    )(patches, w_mat)

    # ---- fold batch statistics + gamma/beta into one per-channel FMA --------
    # Padded rows of `patches` are all-zero (zero conv output, no bias), so they
    # add nothing to the sums; divide by the true row count m.
    inv_m = jnp.float32(1.0 / m)
    mean = csum * inv_m
    var = jnp.maximum(csq * inv_m - mean * mean, 0.0)     # biased variance
    inv_std = lax.rsqrt(var + EPS)
    gp = jnp.pad(gamma.astype(jnp.float32), (0, coutp - cout)).reshape(1, coutp)
    bp = jnp.pad(beta.astype(jnp.float32), (0, coutp - cout)).reshape(1, coutp)
    s = gp * inv_std
    t = bp - mean * s

    # ---- phase 2: elementwise normalize + ReLU (parallel over tiles) --------
    out_flat = pl.pallas_call(
        _bn_relu_kernel,
        out_shape=jax.ShapeDtypeStruct((mp, coutp), x_nchw.dtype),
        grid=(num_tiles,),
        in_specs=[pl.BlockSpec((tm, coutp), lambda i: (i, 0)),
                  pl.BlockSpec((1, coutp), lambda i: (0, 0)),
                  pl.BlockSpec((1, coutp), lambda i: (0, 0))],
        out_specs=pl.BlockSpec((tm, coutp), lambda i: (i, 0)),
        compiler_params=pltpu.CompilerParams(dimension_semantics=("parallel",)),
    )(conv_flat, s, t)

    out_nhwc = out_flat[:m, :cout].reshape(n, ho, wo, cout)
    # NCHW kept to preserve the PyTorch module's output contract.
    return jnp.transpose(out_nhwc, (0, 3, 1, 2))


# -------------------------------- reference --------------------------------- #
def _reference(x_nchw, weight_oihw, gamma, beta, *, stride, padding, dilation):
    conv = lax.conv_general_dilated(
        x_nchw.astype(jnp.float32), weight_oihw.astype(jnp.float32),
        window_strides=(stride, stride),
        padding=[(padding, padding), (padding, padding)],
        rhs_dilation=(dilation, dilation),
        dimension_numbers=("NCHW", "OIHW", "NCHW"))
    mean = conv.mean(axis=(0, 2, 3), keepdims=True)
    var = conv.var(axis=(0, 2, 3), keepdims=True)         # biased, like PyTorch BN
    y = (conv - mean) * lax.rsqrt(var + EPS)
    y = y * gamma.reshape(1, -1, 1, 1) + beta.reshape(1, -1, 1, 1)
    return jnp.maximum(y, 0.0)


# ---------------------------------- main ------------------------------------ #
if __name__ == "__main__":
    # BN_Conv2d(in_channels=4, out_channels=8, kernel_size=3, stride=1, padding=1)
    N, Cin, H, W = 2, 4, 16, 16
    Cout, K, STRIDE, PAD, DIL = 8, 3, 1, 1, 1

    key = jax.random.PRNGKey(0)
    kx, kw, kg, kb = jax.random.split(key, 4)
    x = jax.random.normal(kx, (N, Cin, H, W), dtype=jnp.float32)
    weight = 0.1 * jax.random.normal(kw, (Cout, Cin, K, K), dtype=jnp.float32)
    gamma = 1.0 + 0.1 * jax.random.normal(kg, (Cout,), dtype=jnp.float32)
    beta = 0.1 * jax.random.normal(kb, (Cout,), dtype=jnp.float32)

    # block_m=128 -> 4 grid steps at M=512, exercising the cross-tile stats path.
    out = bn_conv2d_relu(x, weight, gamma, beta,
                         stride=STRIDE, padding=PAD, dilation=DIL, groups=1,
                         block_m=128)
    out = jax.block_until_ready(out)

    ref = _reference(x, weight, gamma, beta, stride=STRIDE, padding=PAD, dilation=DIL)
    # Tolerance loosened for bf16 MXU inputs (f32 accumulation / f32 statistics).
    np.testing.assert_allclose(np.asarray(out), np.asarray(ref), rtol=3e-2, atol=3e-2)
    assert out.shape == (N, Cout, H, W)

    print("KERNEL_OK")
</pallas_src>

<mosaic_0001>
module attributes {stable_mosaic.version = 11 : i64} {
  func.func @_conv_stats_kernel(%arg0: i32, %arg1: memref<128x48xbf16, #tpu.memory_space<vmem>>, %arg2: memref<48x128xbf16, #tpu.memory_space<vmem>>, %arg3: memref<128x128xf32, #tpu.memory_space<vmem>>, %arg4: memref<1x128xf32, #tpu.memory_space<vmem>>, %arg5: memref<1x128xf32, #tpu.memory_space<vmem>>) attributes {dimension_semantics = [#tpu.dimension_semantics<arbitrary>], iteration_bounds = array<i64: 4>, scalar_prefetch = 0 : i64, scratch_operands = 0 : i64, tpu.core_type = #tpu.core_type<tc>, window_params = [{transform_indices = @transform_0, window_bounds = array<i64: 128, 48>}, {pipeline_mode = #tpu.pipeline_mode<synchronous>, transform_indices = @transform_1, window_bounds = array<i64: 48, 128>}, {transform_indices = @transform_2, window_bounds = array<i64: 128, 128>}, {pipeline_mode = #tpu.pipeline_mode<synchronous>, transform_indices = @transform_3, window_bounds = array<i64: 1, 128>}, {pipeline_mode = #tpu.pipeline_mode<synchronous>, transform_indices = @transform_4, window_bounds = array<i64: 1, 128>}]} {
    %c0 = arith.constant 0 : index
    %c0_0 = arith.constant 0 : index
    %0 = vector.load %arg1[%c0, %c0_0] : memref<128x48xbf16, #tpu.memory_space<vmem>>, vector<128x48xbf16>
    %c0_1 = arith.constant 0 : index
    %c0_2 = arith.constant 0 : index
    %1 = vector.load %arg2[%c0_1, %c0_2] : memref<48x128xbf16, #tpu.memory_space<vmem>>, vector<48x128xbf16>
    %cst = arith.constant dense<0.000000e+00> : vector<128x128xf32>
    %2 = tpu.matmul %0, %1, %cst {dimension_numbers = #tpu.dot_dimension_numbers<[1], [0], [0], [1], [0, 0, 1, 1], [], []>} : vector<128x48xbf16>, vector<48x128xbf16>, vector<128x128xf32> -> vector<128x128xf32>
    %c0_3 = arith.constant 0 : index
    %c0_4 = arith.constant 0 : index
    %3 = vector.load %arg3[%c0_3, %c0_4] : memref<128x128xf32, #tpu.memory_space<vmem>>, vector<128x128xf32>
    tpu.vector_store %arg3[%c0_3, %c0_4], %2 {strides = array<i32>} : memref<128x128xf32, #tpu.memory_space<vmem>>, vector<128x128xf32>,
    %cst_5 = arith.constant dense<0.000000e+00> : vector<128xf32>
    %4 = vector.multi_reduction <add>, %2, %cst_5 [0] : vector<128x128xf32> to vector<128xf32>
    %5 = vector.shape_cast %4 : vector<128xf32> to vector<1x128xf32>
    %6 = arith.mulf %2, %2 : vector<128x128xf32>
    %cst_6 = arith.constant dense<0.000000e+00> : vector<128xf32>
    %7 = vector.multi_reduction <add>, %6, %cst_6 [0] : vector<128x128xf32> to vector<128xf32>
    %8 = vector.shape_cast %7 : vector<128xf32> to vector<1x128xf32>
    %c0_i32 = arith.constant 0 : i32
    %9 = arith.cmpi eq, %arg0, %c0_i32 : i32
    %10 = arith.extui %9 : i1 to i32
    %c0_i32_7 = arith.constant 0 : i32
    %11 = arith.cmpi ne, %10, %c0_i32_7 : i32
    scf.if %11 {
      %c0_10 = arith.constant 0 : index
      %c0_11 = arith.constant 0 : index
      %15 = vector.load %arg4[%c0_10, %c0_11] : memref<1x128xf32, #tpu.memory_space<vmem>>, vector<1x128xf32>
      tpu.vector_store %arg4[%c0_10, %c0_11], %5 {strides = array<i32>} : memref<1x128xf32, #tpu.memory_space<vmem>>, vector<1x128xf32>,
      %c0_12 = arith.constant 0 : index
      %c0_13 = arith.constant 0 : index
      %16 = vector.load %arg5[%c0_12, %c0_13] : memref<1x128xf32, #tpu.memory_space<vmem>>, vector<1x128xf32>
      tpu.vector_store %arg5[%c0_12, %c0_13], %8 {strides = array<i32>} : memref<1x128xf32, #tpu.memory_space<vmem>>, vector<1x128xf32>,
    } else {
    }
    %c0_i32_8 = arith.constant 0 : i32
    %12 = arith.cmpi sgt, %arg0, %c0_i32_8 : i32
    %13 = arith.extui %12 : i1 to i32
    %c0_i32_9 = arith.constant 0 : i32
    %14 = arith.cmpi ne, %13, %c0_i32_9 : i32
    scf.if %14 {
      %c0_10 = arith.constant 0 : index
      %c0_11 = arith.constant 0 : index
      %15 = vector.load %arg4[%c0_10, %c0_11] : memref<1x128xf32, #tpu.memory_space<vmem>>, vector<1x128xf32>
      %16 = arith.addf %15, %5 : vector<1x128xf32>
      %c0_12 = arith.constant 0 : index
      %c0_13 = arith.constant 0 : index
      %17 = vector.load %arg4[%c0_12, %c0_13] : memref<1x128xf32, #tpu.memory_space<vmem>>, vector<1x128xf32>
      tpu.vector_store %arg4[%c0_12, %c0_13], %16 {strides = array<i32>} : memref<1x128xf32, #tpu.memory_space<vmem>>, vector<1x128xf32>,
      %c0_14 = arith.constant 0 : index
      %c0_15 = arith.constant 0 : index
      %18 = vector.load %arg5[%c0_14, %c0_15] : memref<1x128xf32, #tpu.memory_space<vmem>>, vector<1x128xf32>
      %19 = arith.addf %18, %8 : vector<1x128xf32>
      %c0_16 = arith.constant 0 : index
      %c0_17 = arith.constant 0 : index
      %20 = vector.load %arg5[%c0_16, %c0_17] : memref<1x128xf32, #tpu.memory_space<vmem>>, vector<1x128xf32>
      tpu.vector_store %arg5[%c0_16, %c0_17], %19 {strides = array<i32>} : memref<1x128xf32, #tpu.memory_space<vmem>>, vector<1x128xf32>,
    } else {
    }
    return
  }
  func.func @transform_0(%arg0: i32) -> (i32, i32) {
    %c0_i32 = arith.constant 0 : i32
    %c0_i32_0 = arith.constant 0 : i32
    return %arg0, %c0_i32 : i32, i32
  }
  func.func @transform_1(%arg0: i32) -> (i32, i32) {
    %c0_i32 = arith.constant 0 : i32
    %c0_i32_0 = arith.constant 0 : i32
    %c0_i32_1 = arith.constant 0 : i32
    return %c0_i32, %c0_i32_0 : i32, i32
  }
  func.func @transform_2(%arg0: i32) -> (i32, i32) {
    %c0_i32 = arith.constant 0 : i32
    %c0_i32_0 = arith.constant 0 : i32
    return %arg0, %c0_i32 : i32, i32
  }
  func.func @transform_3(%arg0: i32) -> (i32, i32) {
    %c0_i32 = arith.constant 0 : i32
    %c0_i32_0 = arith.constant 0 : i32
    %c0_i32_1 = arith.constant 0 : i32
    return %c0_i32, %c0_i32_0 : i32, i32
  }
  func.func @transform_4(%arg0: i32) -> (i32, i32) {
    %c0_i32 = arith.constant 0 : i32
    %c0_i32_0 = arith.constant 0 : i32
    %c0_i32_1 = arith.constant 0 : i32
    return %c0_i32, %c0_i32_0 : i32, i32
  }
}

module attributes {stable_mosaic.version = 11 : i64} {
  func.func @_bn_relu_kernel(%arg0: i32, %arg1: memref<128x128xf32, #tpu.memory_space<vmem>>, %arg2: memref<1x128xf32, #tpu.memory_space<vmem>>, %arg3: memref<1x128xf32, #tpu.memory_space<vmem>>, %arg4: memref<128x128xf32, #tpu.memory_space<vmem>>) attributes {dimension_semantics = [#tpu.dimension_semantics<parallel>], iteration_bounds = array<i64: 4>, scalar_prefetch = 0 : i64, scratch_operands = 0 : i64, tpu.core_type = #tpu.core_type<tc>, window_params = [{transform_indices = @transform_0, window_bounds = array<i64: 128, 128>}, {pipeline_mode = #tpu.pipeline_mode<synchronous>, transform_indices = @transform_1, window_bounds = array<i64: 1, 128>}, {pipeline_mode = #tpu.pipeline_mode<synchronous>, transform_indices = @transform_2, window_bounds = array<i64: 1, 128>}, {transform_indices = @transform_3, window_bounds = array<i64: 128, 128>}]} {
    %c0 = arith.constant 0 : index
    %c0_0 = arith.constant 0 : index
    %0 = vector.load %arg1[%c0, %c0_0] : memref<128x128xf32, #tpu.memory_space<vmem>>, vector<128x128xf32>
    %c0_1 = arith.constant 0 : index
    %c0_2 = arith.constant 0 : index
    %1 = vector.load %arg2[%c0_1, %c0_2] : memref<1x128xf32, #tpu.memory_space<vmem>>, vector<1x128xf32>
    %2 = vector.broadcast %1 : vector<1x128xf32> to vector<128x128xf32>
    %3 = arith.mulf %0, %2 : vector<128x128xf32>
    %c0_3 = arith.constant 0 : index
    %c0_4 = arith.constant 0 : index
    %4 = vector.load %arg3[%c0_3, %c0_4] : memref<1x128xf32, #tpu.memory_space<vmem>>, vector<1x128xf32>
    %5 = vector.broadcast %4 : vector<1x128xf32> to vector<128x128xf32>
    %6 = arith.addf %3, %5 : vector<128x128xf32>
    %cst = arith.constant 0.000000e+00 : f32
    %7 = vector.broadcast %cst : f32 to vector<128x128xf32>
    %8 = arith.maximumf %6, %7 : vector<128x128xf32>
    %c0_5 = arith.constant 0 : index
    %c0_6 = arith.constant 0 : index
    %9 = vector.load %arg4[%c0_5, %c0_6] : memref<128x128xf32, #tpu.memory_space<vmem>>, vector<128x128xf32>
    tpu.vector_store %arg4[%c0_5, %c0_6], %8 {strides = array<i32>} : memref<128x128xf32, #tpu.memory_space<vmem>>, vector<128x128xf32>,
    return
  }
  func.func @transform_0(%arg0: i32) -> (i32, i32) {
    %c0_i32 = arith.constant 0 : i32
    %c0_i32_0 = arith.constant 0 : i32
    return %arg0, %c0_i32 : i32, i32
  }
  func.func @transform_1(%arg0: i32) -> (i32, i32) {
    %c0_i32 = arith.constant 0 : i32
    %c0_i32_0 = arith.constant 0 : i32
    %c0_i32_1 = arith.constant 0 : i32
    return %c0_i32, %c0_i32_0 : i32, i32
  }
  func.func @transform_2(%arg0: i32) -> (i32, i32) {
    %c0_i32 = arith.constant 0 : i32
    %c0_i32_0 = arith.constant 0 : i32
    %c0_i32_1 = arith.constant 0 : i32
    return %c0_i32, %c0_i32_0 : i32, i32
  }
  func.func @transform_3(%arg0: i32) -> (i32, i32) {
    %c0_i32 = arith.constant 0 : i32
    %c0_i32_0 = arith.constant 0 : i32
    return %arg0, %c0_i32 : i32, i32
  }
}

</mosaic_0001>

<llo_original>
// kernel: bn_conv2d_relu.3
$region0: #{bn_conv2d_relu.3}
  #allocation0 [shape = 'u32[]', space=smem, size = 0x4, offset = 0x4, fixed_abs, tag = 'smem constant byte address 0x4 - core index']
  #allocation1 [shape = 'u32[144,128]{1,0:T(1,128)}', space=vmem, size = 0x12000, scoped, tag = 'internal scratch']
  %s0 = inlined_call_operand.vmem [shape: f32[512,128], index: 0, kind: input, shape index: {}]
  %s1 = inlined_call_operand.vmem [shape: f32[1,128], index: 1, kind: input, shape index: {}]
  %s2 = inlined_call_operand.vmem [shape: f32[1,128], index: 2, kind: input, shape index: {}]
  %s3 = inlined_call_operand.vmem [shape: f32[512,128], index: 3, kind: output, shape index: {}]
  %s4 = sld [smem:[#allocation0]]
  $region45: #{bn_conv2d_relu.3} parent=0
    _
  %s6 = ssub.s32 1, %s4
  %s7 = scalar_select 0, %s6, %s4
  loop: start=0, step=1, limit=6
  $region2: #{bn_conv2d_relu.3} parent=0 // loop_pre_header
    _
  $region3: #{bn_conv2d_relu.3} parent=0 // loop_header
    %s9 = sphi 0, %s13
    %p10 = scmp.ge.s32.totalorder %s9, 6
    %s19 = sphi 0, %s21
    %s22 = sphi 0, %s19
    %s23 = sphi 0, %s22
    %s39 = sphi 0, %s23
    %s43 = sphi 0, %s43
    %s45 = sphi 0, %s43
    %s46 = sphi 0, %s45
    %s60 = sphi 0, %s46
    %s64 = sphi 0, %s64
    %s66 = sphi 0, %s64
    %s67 = sphi 0, %s66
    %s81 = sphi 0, %s67
    %s87 = sphi 0, %s89
    %s90 = sphi 0, %s87
    %s91 = sphi 0, %s90
    %s107 = sphi 0, %s91
  $region4: #{bn_conv2d_relu.3} parent=0 // loop_header_branch
    %12 = sbr.rel (%p10) target = $region8
  $region5: #{bn_conv2d_relu.3} parent=0 // loop_body
    %s14 = ssub.s32 %s9, 1
    %s15 = ssub.s32 %s9, 2
    %s16 = sadd.s32 %s9, 1
    %s17 = ssub.s32 %s9, %s16
    %p18 = scmp.eq.s32.totalorder %s17, 0
    %s20 = sadd.s32 %s19, 1
    %s21 = scalar_select %p18, %s19, %s20
    %p24 = pneg %p18
    %p25 = scmp.eq.s32.totalorder %s9, 3
    %p26 = por %p24, %p25
    %p27 = scmp.ne.s32.totalorder %s19, %s22
    %p28 = scmp.eq.s32.totalorder %s9, 0
    %p29 = por %p27, %p28
    %p30 = scmp.ne.s32.totalorder %s19, %s22
    %p31 = scmp.eq.s32.totalorder %s14, 3
    %p32 = por %p30, %p31
    %p33 = scmp.ne.s32.totalorder %s22, %s23
    %p34 = scmp.eq.s32.totalorder %s14, 0
    %p35 = por %p33, %p34
    %p36 = scmp.ne.s32.totalorder %s22, %s23
    %p37 = scmp.eq.s32.totalorder %s15, 3
    %p38 = por %p36, %p37
    %p40 = scmp.ne.s32.totalorder %s23, %s39
    %p41 = scmp.eq.s32.totalorder %s15, 0
    %p42 = por %p40, %p41
    %s44 = sadd.s32 %s43, 1
    %p47 = scmp.eq.s32.totalorder %s9, 3
    %p48 = scmp.ne.s32.totalorder %s43, %s45
    %p49 = scmp.eq.s32.totalorder %s9, 0
    %p50 = por %p48, %p49
    %p51 = scmp.ne.s32.totalorder %s43, %s45
    %p52 = scmp.eq.s32.totalorder %s14, 3
    %p53 = por %p51, %p52
    %p54 = scmp.ne.s32.totalorder %s45, %s46
    %p55 = scmp.eq.s32.totalorder %s14, 0
    %p56 = por %p54, %p55
    %p57 = scmp.ne.s32.totalorder %s45, %s46
    %p58 = scmp.eq.s32.totalorder %s15, 3
    %p59 = por %p57, %p58
    %p61 = scmp.ne.s32.totalorder %s46, %s60
    %p62 = scmp.eq.s32.totalorder %s15, 0
    %p63 = por %p61, %p62
    %s65 = sadd.s32 %s64, 1
    %p68 = scmp.eq.s32.totalorder %s9, 3
    %p69 = scmp.ne.s32.totalorder %s64, %s66
    %p70 = scmp.eq.s32.totalorder %s9, 0
    %p71 = por %p69, %p70
    %p72 = scmp.ne.s32.totalorder %s64, %s66
    %p73 = scmp.eq.s32.totalorder %s14, 3
    %p74 = por %p72, %p73
    %p75 = scmp.ne.s32.totalorder %s66, %s67
    %p76 = scmp.eq.s32.totalorder %s14, 0
    %p77 = por %p75, %p76
    %p78 = scmp.ne.s32.totalorder %s66, %s67
    %p79 = scmp.eq.s32.totalorder %s15, 3
    %p80 = por %p78, %p79
    %p82 = scmp.ne.s32.totalorder %s67, %s81
    %p83 = scmp.eq.s32.totalorder %s15, 0
    %p84 = por %p82, %p83
    %s85 = ssub.s32 %s9, %s16
    %p86 = scmp.eq.s32.totalorder %s85, 0
    %s88 = sadd.s32 %s87, 1
    %s89 = scalar_select %p86, %s87, %s88
    %p92 = pneg %p86
    %p93 = scmp.eq.s32.totalorder %s9, 3
    %p94 = por %p92, %p93
    %p95 = scmp.ne.s32.totalorder %s87, %s90
    %p96 = scmp.eq.s32.totalorder %s9, 0
    %p97 = por %p95, %p96
    %p98 = scmp.ne.s32.totalorder %s87, %s90
    %p99 = scmp.eq.s32.totalorder %s14, 3
    %p100 = por %p98, %p99
    %p101 = scmp.ne.s32.totalorder %s90, %s91
    %p102 = scmp.eq.s32.totalorder %s14, 0
    %p103 = por %p101, %p102
    %p104 = scmp.ne.s32.totalorder %s90, %s91
    %p105 = scmp.eq.s32.totalorder %s15, 3
    %p106 = por %p104, %p105
    %p108 = scmp.ne.s32.totalorder %s91, %s107
    %p109 = scmp.eq.s32.totalorder %s15, 0
    %p110 = por %p108, %p109
    %p111 = scmp.le.s32.totalorder 1, %s9
    %p112 = scmp.lt.s32.totalorder %s9, 5
    %p113 = pnand %p111, %p112
    %p114 = pneg %p113
    // Predicated region
    $region9: #{bn_conv2d_relu.3} parent=5 // pred_check
      _
    $region10: #{bn_conv2d_relu.3} parent=5 // pred_check_branch
      %116 = sbr.rel (%p113) target = $region12
    $region11: #{bn_conv2d_relu.3} parent=5 // pred_region
      %s117 = ssub.s32 %s9, 1
      // Predicated region
      $region13: #{bn_conv2d_relu.3} parent=11 // pred_check
        %p118 = pneg %p56
      $region14: #{bn_conv2d_relu.3} parent=11 // pred_check_branch
        %120 = sbr.rel (%p118) target = $region16
      $region15: #{bn_conv2d_relu.3} parent=11 // pred_region
        _
      $region16: #{bn_conv2d_relu.3} parent=11 // pred_fallthru
        _
      // Predicated region
      $region17: #{bn_conv2d_relu.3} parent=11 // pred_check
        %p121 = pneg %p77
      $region18: #{bn_conv2d_relu.3} parent=11 // pred_check_branch
        %123 = sbr.rel (%p121) target = $region20
      $region19: #{bn_conv2d_relu.3} parent=11 // pred_region
        _
      $region20: #{bn_conv2d_relu.3} parent=11 // pred_fallthru
        _
    $region12: #{bn_conv2d_relu.3} parent=5 // pred_fallthru
      _
    %p124 = scmp.lt.s32.totalorder %s9, 4
    // Predicated region
    $region21: #{bn_conv2d_relu.3} parent=5 // pred_check
      %p125 = pneg %p124
    $region22: #{bn_conv2d_relu.3} parent=5 // pred_check_branch
      %127 = sbr.rel (%p125) target = $region24
    $region23: #{bn_conv2d_relu.3} parent=5 // pred_region
      // Predicated region
      $region25: #{bn_conv2d_relu.3} parent=23 // pred_check
        %p128 = pneg %p29
      $region26: #{bn_conv2d_relu.3} parent=23 // pred_check_branch
        %130 = sbr.rel (%p128) target = $region28
      $region27: #{bn_conv2d_relu.3} parent=23 // pred_region
        %s131 = smul.u32 16, %s9
        %p132 = scmp.lt.s32.totalorder %s131, 63
        %s133 = scalar_select %p132, %s131, 63
        %s134 = smul.addr %s133, 8
        %s135 = scalar_lea.vmem %s0, %s134
        %s136 = smul.u32 16, %s9
      $region28: #{bn_conv2d_relu.3} parent=23 // pred_fallthru
        _
    $region24: #{bn_conv2d_relu.3} parent=5 // pred_fallthru
      _
    %p137 = scmp.le.s32.totalorder 1, %s9
    %p138 = scmp.lt.s32.totalorder %s9, 5
    %p139 = pnand %p137, %p138
    %p140 = pneg %p139
    // Predicated region
    $region29: #{bn_conv2d_relu.3} parent=5 // pred_check
      _
    $region30: #{bn_conv2d_relu.3} parent=5 // pred_check_branch
      %142 = sbr.rel (%p139) target = $region32
    $region31: #{bn_conv2d_relu.3} parent=5 // pred_region
      %s143 = ssub.s32 %s9, 1
      %s144 = smul.u32 16, %s14
      %p145 = scmp.lt.s32.totalorder %s144, 63
      %s146 = scalar_select %p145, %s144, 63
      %s147 = smul.addr %s146, 8
      %s148 = scalar_lea.vmem %s0, %s147
      %p149 = pneg %p35
      %p150 = pneg %p32
      %p151 = pneg %p56
      %p152 = pneg %p53
      %p153 = pneg %p77
      %p154 = pneg %p74
      %p155 = pneg %p103
      %p156 = pneg %p100
      %s157 = smul.u32 16, %s14
      %p158 = scmp.lt.s32.totalorder %s157, 63
      %s159 = scalar_select %p158, %s157, 63
      %s160 = smul.addr %s159, 8
      %s161 = scalar_lea.vmem %s3, %s160
      %s162 = smul.u32 16, %s14
      %p163 = scmp.lt.s32.totalorder %s162, 63
      %s164 = scalar_select %p163, %s162, 63
      %s165 = smul.addr %s164, 8
      %s166 = scalar_lea.vmem %s0, %s165
      %s167 = smul.u32 16, %s14
      %s168 = smul.u32 16, %s14
      %p169 = scmp.lt.s32.totalorder %s168, 63
      %s170 = scalar_select %p169, %s168, 63
      %s171 = smul.addr %s170, 8
      %s172 = scalar_lea.vmem %s3, %s171
      %s173 = smul.u32 16, %s14
      %v174 = vld [vmem:[%s166] sm:$0xff]
      %v175 = vld [vmem:[%s166 + $0x8] sm:$0xff]
      %v176 = vld [vmem:[%s166 + $0x10] sm:$0xff]
      %v177 = vld [vmem:[%s166 + $0x18] sm:$0xff]
      %v178 = vld [vmem:[%s166 + $0x20] sm:$0xff]
      %v179 = vld [vmem:[%s166 + $0x28] sm:$0xff]
      %v180 = vld [vmem:[%s166 + $0x30] sm:$0xff]
      %v181 = vld [vmem:[%s166 + $0x38] sm:$0xff]
      %v182 = vld [vmem:[%s166 + $0x40] sm:$0xff]
      %v183 = vld [vmem:[%s166 + $0x48] sm:$0xff]
      %v184 = vld [vmem:[%s166 + $0x50] sm:$0xff]
      %v185 = vld [vmem:[%s166 + $0x58] sm:$0xff]
      %v186 = vld [vmem:[%s166 + $0x60] sm:$0xff]
      %v187 = vld [vmem:[%s166 + $0x68] sm:$0xff]
      %v188 = vld [vmem:[%s166 + $0x70] sm:$0xff]
      %v189 = vld [vmem:[%s166 + $0x78] sm:$0xff]
      %v190 = vld [vmem:[%s1] sm:$0x1]
      %v192 = vlaneseq
      %v193 = vshrl.u32 %v192, 7
      %v194 = vsub.s32 0, %v193
      %v195 = vrot.slane %v190, %v194
      %v197 = vmul.f32 %v174, %v195
      %v198 = vmul.f32 %v175, %v195
      %v199 = vmul.f32 %v176, %v195
      %v200 = vmul.f32 %v177, %v195
      %v201 = vmul.f32 %v178, %v195
      %v202 = vmul.f32 %v179, %v195
      %v203 = vmul.f32 %v180, %v195
      %v204 = vmul.f32 %v181, %v195
      %v205 = vmul.f32 %v182, %v195
      %v206 = vmul.f32 %v183, %v195
      %v207 = vmul.f32 %v184, %v195
      %v208 = vmul.f32 %v185, %v195
      %v209 = vmul.f32 %v186, %v195
      %v210 = vmul.f32 %v187, %v195
      %v211 = vmul.f32 %v188, %v195
      %v212 = vmul.f32 %v189, %v195
      %v213 = vld [vmem:[%s2] sm:$0x1]
      %v215 = vlaneseq
      %v216 = vshrl.u32 %v215, 7
      %v217 = vsub.s32 0, %v216
      %v218 = vrot.slane %v213, %v217
      %v220 = vadd.f32 %v197, %v218
      %v221 = vadd.f32 %v198, %v218
      %v222 = vadd.f32 %v199, %v218
      %v223 = vadd.f32 %v200, %v218
      %v224 = vadd.f32 %v201, %v218
      %v225 = vadd.f32 %v202, %v218
      %v226 = vadd.f32 %v203, %v218
      %v227 = vadd.f32 %v204, %v218
      %v228 = vadd.f32 %v205, %v218
      %v229 = vadd.f32 %v206, %v218
      %v230 = vadd.f32 %v207, %v218
      %v231 = vadd.f32 %v208, %v218
      %v232 = vadd.f32 %v209, %v218
      %v233 = vadd.f32 %v210, %v218
      %v234 = vadd.f32 %v211, %v218
      %v235 = vadd.f32 %v212, %v218
      %v236 = vmax.f32 %v220, 0.0
      %v237 = vmax.f32 %v221, 0.0
      %v238 = vmax.f32 %v222, 0.0
      %v239 = vmax.f32 %v223, 0.0
      %v240 = vmax.f32 %v224, 0.0
      %v241 = vmax.f32 %v225, 0.0
      %v242 = vmax.f32 %v226, 0.0
      %v243 = vmax.f32 %v227, 0.0
      %v244 = vmax.f32 %v228, 0.0
      %v245 = vmax.f32 %v229, 0.0
      %v246 = vmax.f32 %v230, 0.0
      %v247 = vmax.f32 %v231, 0.0
      %v248 = vmax.f32 %v232, 0.0
      %v249 = vmax.f32 %v233, 0.0
      %v250 = vmax.f32 %v234, 0.0
      %v251 = vmax.f32 %v235, 0.0
      %252 = vst [vmem:[%s172] sm:$0xff] %v236
      %253 = vst [vmem:[%s172 + $0x8] sm:$0xff] %v237
      %254 = vst [vmem:[%s172 + $0x10] sm:$0xff] %v238
      %255 = vst [vmem:[%s172 + $0x18] sm:$0xff] %v239
      %256 = vst [vmem:[%s172 + $0x20] sm:$0xff] %v240
      %257 = vst [vmem:[%s172 + $0x28] sm:$0xff] %v241
      %258 = vst [vmem:[%s172 + $0x30] sm:$0xff] %v242
      %259 = vst [vmem:[%s172 + $0x38] sm:$0xff] %v243
      %260 = vst [vmem:[%s172 + $0x40] sm:$0xff] %v244
      %261 = vst [vmem:[%s172 + $0x48] sm:$0xff] %v245
      %262 = vst [vmem:[%s172 + $0x50] sm:$0xff] %v246
      %263 = vst [vmem:[%s172 + $0x58] sm:$0xff] %v247
      %264 = vst [vmem:[%s172 + $0x60] sm:$0xff] %v248
      %265 = vst [vmem:[%s172 + $0x68] sm:$0xff] %v249
      %266 = vst [vmem:[%s172 + $0x70] sm:$0xff] %v250
      %267 = vst [vmem:[%s172 + $0x78] sm:$0xff] %v251
      %s268 = smul.u32 16, %s14
      %p269 = scmp.lt.s32.totalorder %s268, 63
      %s270 = scalar_select %p269, %s268, 63
      %s271 = smul.addr %s270, 8
      %s272 = scalar_lea.vmem %s3, %s271
      // Predicated region
      $region33: #{bn_conv2d_relu.3} parent=31 // pred_check
        %p273 = pneg %p100
      $region34: #{bn_conv2d_relu.3} parent=31 // pred_check_branch
        %275 = sbr.rel (%p273) target = $region36
      $region35: #{bn_conv2d_relu.3} parent=31 // pred_region
        %s276 = smul.u32 16, %s14
      $region36: #{bn_conv2d_relu.3} parent=31 // pred_fallthru
        _
    $region32: #{bn_conv2d_relu.3} parent=5 // pred_fallthru
      _
    %p277 = scmp.le.s32.totalorder 2, %s9
    // Predicated region
    $region37: #{bn_conv2d_relu.3} parent=5 // pred_check
      %p278 = pneg %p277
    $region38: #{bn_conv2d_relu.3} parent=5 // pred_check_branch
      %280 = sbr.rel (%p278) target = $region40
    $region39: #{bn_conv2d_relu.3} parent=5 // pred_region
      %s281 = ssub.s32 %s9, 2
      // Predicated region
      $region41: #{bn_conv2d_relu.3} parent=39 // pred_check
        %p282 = pneg %p106
      $region42: #{bn_conv2d_relu.3} parent=39 // pred_check_branch
        %284 = sbr.rel (%p282) target = $region44
      $region43: #{bn_conv2d_relu.3} parent=39 // pred_region
        %s285 = smul.u32 16, %s15
        %p286 = scmp.lt.s32.totalorder %s285, 63
        %s287 = scalar_select %p286, %s285, 63
        %s288 = smul.addr %s287, 8
        %s289 = scalar_lea.vmem %s3, %s288
      $region44: #{bn_conv2d_relu.3} parent=39 // pred_fallthru
        _
    $region40: #{bn_conv2d_relu.3} parent=5 // pred_fallthru
      _
  $region6: #{bn_conv2d_relu.3} parent=0 // loop_footer
    %s13 = sadd.s32 1, %s9
  $region7: #{bn_conv2d_relu.3} parent=0 // loop_footer_branch
    %8 = sbr.rel target = $region3
  $region8: #{bn_conv2d_relu.3} parent=0 // loop_exit
    _

// kernel: bn_conv2d_relu.2
$region0: #{bn_conv2d_relu.2}
  #allocation0 [shape = 'u32[]', space=smem, size = 0x4, offset = 0x4, fixed_abs, tag = 'smem constant byte address 0x4 - core index']
  #allocation1 [shape = 'u32[144,128]{1,0:T(1,128)}', space=vmem, size = 0x12000, scoped, tag = 'internal scratch']
  %s0 = inlined_call_operand.vmem [shape: bf16[512,48], index: 0, kind: input, shape index: {}]
  %s1 = inlined_call_operand.vmem [shape: bf16[48,128], index: 1, kind: input, shape index: {}]
  %s2 = inlined_call_operand.vmem [shape: f32[512,128], index: 2, kind: output, shape index: {0}]
  %s3 = inlined_call_operand.vmem [shape: f32[1,128], index: 3, kind: output, shape index: {1}]
  %s4 = inlined_call_operand.vmem [shape: f32[1,128], index: 4, kind: output, shape index: {2}]
  %5 = xla_tuple %s2, %s3, %s4
  %s6 = sld [smem:[#allocation0]]
  $region65: #{bn_conv2d_relu.2} parent=0
    _
  %s8 = ssub.s32 1, %s6
  %s9 = scalar_select 0, %s8, %s6
  loop: start=0, step=1, limit=6
  $region2: #{bn_conv2d_relu.2} parent=0 // loop_pre_header
    _
  $region3: #{bn_conv2d_relu.2} parent=0 // loop_header
    %s11 = sphi 0, %s15
    %p12 = scmp.ge.s32.totalorder %s11, 6
    %s21 = sphi 0, %s23
    %s24 = sphi 0, %s21
    %s25 = sphi 0, %s24
    %s41 = sphi 0, %s25
    %s45 = sphi 0, %s45
    %s47 = sphi 0, %s45
    %s48 = sphi 0, %s47
    %s62 = sphi 0, %s48
    %s68 = sphi 0, %s70
    %s71 = sphi 0, %s68
    %s72 = sphi 0, %s71
    %s88 = sphi 0, %s72
    %s92 = sphi 0, %s92
    %s94 = sphi 0, %s92
    %s95 = sphi 0, %s94
    %s109 = sphi 0, %s95
    %s113 = sphi 0, %s113
    %s115 = sphi 0, %s113
    %s116 = sphi 0, %s115
    %s130 = sphi 0, %s116
  $region4: #{bn_conv2d_relu.2} parent=0 // loop_header_branch
    %14 = sbr.rel (%p12) target = $region8
  $region5: #{bn_conv2d_relu.2} parent=0 // loop_body
    %s16 = ssub.s32 %s11, 1
    %s17 = ssub.s32 %s11, 2
    %s18 = sadd.s32 %s11, 1
    %s19 = ssub.s32 %s11, %s18
    %p20 = scmp.eq.s32.totalorder %s19, 0
    %s22 = sadd.s32 %s21, 1
    %s23 = scalar_select %p20, %s21, %s22
    %p26 = pneg %p20
    %p27 = scmp.eq.s32.totalorder %s11, 3
    %p28 = por %p26, %p27
    %p29 = scmp.ne.s32.totalorder %s21, %s24
    %p30 = scmp.eq.s32.totalorder %s11, 0
    %p31 = por %p29, %p30
    %p32 = scmp.ne.s32.totalorder %s21, %s24
    %p33 = scmp.eq.s32.totalorder %s16, 3
    %p34 = por %p32, %p33
    %p35 = scmp.ne.s32.totalorder %s24, %s25
    %p36 = scmp.eq.s32.totalorder %s16, 0
    %p37 = por %p35, %p36
    %p38 = scmp.ne.s32.totalorder %s24, %s25
    %p39 = scmp.eq.s32.totalorder %s17, 3
    %p40 = por %p38, %p39
    %p42 = scmp.ne.s32.totalorder %s25, %s41
    %p43 = scmp.eq.s32.totalorder %s17, 0
    %p44 = por %p42, %p43
    %s46 = sadd.s32 %s45, 1
    %p49 = scmp.eq.s32.totalorder %s11, 3
    %p50 = scmp.ne.s32.totalorder %s45, %s47
    %p51 = scmp.eq.s32.totalorder %s11, 0
    %p52 = por %p50, %p51
    %p53 = scmp.ne.s32.totalorder %s45, %s47
    %p54 = scmp.eq.s32.totalorder %s16, 3
    %p55 = por %p53, %p54
    %p56 = scmp.ne.s32.totalorder %s47, %s48
    %p57 = scmp.eq.s32.totalorder %s16, 0
    %p58 = por %p56, %p57
    %p59 = scmp.ne.s32.totalorder %s47, %s48
    %p60 = scmp.eq.s32.totalorder %s17, 3
    %p61 = por %p59, %p60
    %p63 = scmp.ne.s32.totalorder %s48, %s62
    %p64 = scmp.eq.s32.totalorder %s17, 0
    %p65 = por %p63, %p64
    %s66 = ssub.s32 %s11, %s18
    %p67 = scmp.eq.s32.totalorder %s66, 0
    %s69 = sadd.s32 %s68, 1
    %s70 = scalar_select %p67, %s68, %s69
    %p73 = pneg %p67
    %p74 = scmp.eq.s32.totalorder %s11, 3
    %p75 = por %p73, %p74
    %p76 = scmp.ne.s32.totalorder %s68, %s71
    %p77 = scmp.eq.s32.totalorder %s11, 0
    %p78 = por %p76, %p77
    %p79 = scmp.ne.s32.totalorder %s68, %s71
    %p80 = scmp.eq.s32.totalorder %s16, 3
    %p81 = por %p79, %p80
    %p82 = scmp.ne.s32.totalorder %s71, %s72
    %p83 = scmp.eq.s32.totalorder %s16, 0
    %p84 = por %p82, %p83
    %p85 = scmp.ne.s32.totalorder %s71, %s72
    %p86 = scmp.eq.s32.totalorder %s17, 3
    %p87 = por %p85, %p86
    %p89 = scmp.ne.s32.totalorder %s72, %s88
    %p90 = scmp.eq.s32.totalorder %s17, 0
    %p91 = por %p89, %p90
    %s93 = sadd.s32 %s92, 1
    %p96 = scmp.eq.s32.totalorder %s11, 3
    %p97 = scmp.ne.s32.totalorder %s92, %s94
    %p98 = scmp.eq.s32.totalorder %s11, 0
    %p99 = por %p97, %p98
    %p100 = scmp.ne.s32.totalorder %s92, %s94
    %p101 = scmp.eq.s32.totalorder %s16, 3
    %p102 = por %p100, %p101
    %p103 = scmp.ne.s32.totalorder %s94, %s95
    %p104 = scmp.eq.s32.totalorder %s16, 0
    %p105 = por %p103, %p104
    %p106 = scmp.ne.s32.totalorder %s94, %s95
    %p107 = scmp.eq.s32.totalorder %s17, 3
    %p108 = por %p106, %p107
    %p110 = scmp.ne.s32.totalorder %s95, %s109
    %p111 = scmp.eq.s32.totalorder %s17, 0
    %p112 = por %p110, %p111
    %s114 = sadd.s32 %s113, 1
    %p117 = scmp.eq.s32.totalorder %s11, 3
    %p118 = scmp.ne.s32.totalorder %s113, %s115
    %p119 = scmp.eq.s32.totalorder %s11, 0
    %p120 = por %p118, %p119
    %p121 = scmp.ne.s32.totalorder %s113, %s115
    %p122 = scmp.eq.s32.totalorder %s16, 3
    %p123 = por %p121, %p122
    %p124 = scmp.ne.s32.totalorder %s115, %s116
    %p125 = scmp.eq.s32.totalorder %s16, 0
    %p126 = por %p124, %p125
    %p127 = scmp.ne.s32.totalorder %s115, %s116
    %p128 = scmp.eq.s32.totalorder %s17, 3
    %p129 = por %p127, %p128
    %p131 = scmp.ne.s32.totalorder %s116, %s130
    %p132 = scmp.eq.s32.totalorder %s17, 0
    %p133 = por %p131, %p132
    %p134 = scmp.le.s32.totalorder 1, %s11
    %p135 = scmp.lt.s32.totalorder %s11, 5
    %p136 = pnand %p134, %p135
    %p137 = pneg %p136
    // Predicated region
    $region9: #{bn_conv2d_relu.2} parent=5 // pred_check
      _
    $region10: #{bn_conv2d_relu.2} parent=5 // pred_check_branch
      %139 = sbr.rel (%p136) target = $region12
    $region11: #{bn_conv2d_relu.2} parent=5 // pred_region
      %s140 = ssub.s32 %s11, 1
      // Predicated region
      $region13: #{bn_conv2d_relu.2} parent=11 // pred_check
        %p141 = pneg %p58
      $region14: #{bn_conv2d_relu.2} parent=11 // pred_check_branch
        %143 = sbr.rel (%p141) target = $region16
      $region15: #{bn_conv2d_relu.2} parent=11 // pred_region
        _
      $region16: #{bn_conv2d_relu.2} parent=11 // pred_fallthru
        _
    $region12: #{bn_conv2d_relu.2} parent=5 // pred_fallthru
      _
    %p144 = scmp.lt.s32.totalorder %s11, 4
    // Predicated region
    $region17: #{bn_conv2d_relu.2} parent=5 // pred_check
      %p145 = pneg %p144
    $region18: #{bn_conv2d_relu.2} parent=5 // pred_check_branch
      %147 = sbr.rel (%p145) target = $region20
    $region19: #{bn_conv2d_relu.2} parent=5 // pred_region
      // Predicated region
      $region21: #{bn_conv2d_relu.2} parent=19 // pred_check
        %p148 = pneg %p31
      $region22: #{bn_conv2d_relu.2} parent=19 // pred_check_branch
        %150 = sbr.rel (%p148) target = $region24
      $region23: #{bn_conv2d_relu.2} parent=19 // pred_region
        %s151 = smul.u32 16, %s11
        %p152 = scmp.lt.s32.totalorder %s151, 63
        %s153 = scalar_select %p152, %s151, 63
        %s154 = smul.addr %s153, 4
        %s155 = scalar_lea.vmem %s0, %s154
        %s156 = smul.u32 16, %s11
      $region24: #{bn_conv2d_relu.2} parent=19 // pred_fallthru
        _
    $region20: #{bn_conv2d_relu.2} parent=5 // pred_fallthru
      _
    %p157 = scmp.le.s32.totalorder 1, %s11
    %p158 = scmp.lt.s32.totalorder %s11, 5
    %p159 = pnand %p157, %p158
    %p160 = pneg %p159
    // Predicated region
    $region25: #{bn_conv2d_relu.2} parent=5 // pred_check
      _
    $region26: #{bn_conv2d_relu.2} parent=5 // pred_check_branch
      %162 = sbr.rel (%p159) target = $region28
    $region27: #{bn_conv2d_relu.2} parent=5 // pred_region
      %s163 = ssub.s32 %s11, 1
      %s164 = smul.u32 16, %s16
      %p165 = scmp.lt.s32.totalorder %s164, 63
      %s166 = scalar_select %p165, %s164, 63
      %s167 = smul.addr %s166, 4
      %s168 = scalar_lea.vmem %s0, %s167
      %p169 = pneg %p37
      %p170 = pneg %p34
      %p171 = pneg %p58
      %p172 = pneg %p55
      %p173 = pneg %p84
      %p174 = pneg %p81
      %s175 = smul.u32 16, %s16
      %p176 = scmp.lt.s32.totalorder %s175, 63
      %s177 = scalar_select %p176, %s175, 63
      %s178 = smul.addr %s177, 8
      %s179 = scalar_lea.vmem %s2, %s178
      %p180 = pneg %p105
      %p181 = pneg %p102
      %p182 = pneg %p126
      %p183 = pneg %p123
      %s184 = smul.u32 16, %s16
      %p185 = scmp.lt.s32.totalorder %s184, 63
      %s186 = scalar_select %p185, %s184, 63
      %s187 = smul.addr %s186, 4
      %s188 = scalar_lea.vmem %s0, %s187
      %s189 = smul.u32 16, %s16
      %s190 = smul.u32 16, %s16
      %p191 = scmp.lt.s32.totalorder %s190, 63
      %s192 = scalar_select %p191, %s190, 63
      %s193 = smul.addr %s192, 8
      %s194 = scalar_lea.vmem %s2, %s193
      %s195 = smul.u32 16, %s16
      %v197 = vld [vmem:[%s188] sm:$0xf]
      %v198 = vld [vmem:[%s188 + $0x4] sm:$0xf]
      %v199 = vld [vmem:[%s188 + $0x8] sm:$0xf]
      %v200 = vld [vmem:[%s188 + $0xc] sm:$0xf]
      %v201 = vld [vmem:[%s188 + $0x10] sm:$0xf]
      %v202 = vld [vmem:[%s188 + $0x14] sm:$0xf]
      %v203 = vld [vmem:[%s188 + $0x18] sm:$0xf]
      %v204 = vld [vmem:[%s188 + $0x1c] sm:$0xf]
      %v205 = vld [vmem:[%s188 + $0x20] sm:$0xf]
      %v206 = vld [vmem:[%s188 + $0x24] sm:$0xf]
      %v207 = vld [vmem:[%s188 + $0x28] sm:$0xf]
      %v208 = vld [vmem:[%s188 + $0x2c] sm:$0xf]
      %v209 = vld [vmem:[%s188 + $0x30] sm:$0xf]
      %v210 = vld [vmem:[%s188 + $0x34] sm:$0xf]
      %v211 = vld [vmem:[%s188 + $0x38] sm:$0xf]
      %v212 = vld [vmem:[%s188 + $0x3c] sm:$0xf]
      %v213 = vld [vmem:[%s1] sm:$0xf]
      %v214 = vld [vmem:[%s1 + $0x4] sm:$0xf]
      %v215 = vld [vmem:[%s1 + $0x8] sm:$0xf]
      %v216 = vld [vmem:[%s1 + $0xc] sm:$0xf]
      %v217 = vld [vmem:[%s1 + $0x10] sm:$0xf]
      %v218 = vld [vmem:[%s1 + $0x14] sm:$0xf]
      %v235 = vunpack.c.l.b16 %v197
      %v236 = vunpack.c.l.b16 %v198
      %v237 = vunpack.c.l.b16 %v199
      %v238 = vunpack.c.l.b16 %v200
      %v239 = vunpack.c.l.b16 %v201
      %v240 = vunpack.c.l.b16 %v202
      %v241 = vunpack.c.l.b16 %v203
      %v242 = vunpack.c.l.b16 %v204
      %v243 = vunpack.c.l.b16 %v205
      %v244 = vunpack.c.l.b16 %v206
      %v245 = vunpack.c.l.b16 %v207
      %v246 = vunpack.c.l.b16 %v208
      %v247 = vunpack.c.l.b16 %v209
      %v248 = vunpack.c.l.b16 %v210
      %v249 = vunpack.c.l.b16 %v211
      %v250 = vunpack.c.l.b16 %v212
      %v251 = vpack.c.b16 %v236, %v235
      %v252 = vpack.c.b16 %v238, %v237
      %v253 = vpack.c.b16 %v240, %v239
      %v254 = vpack.c.b16 %v242, %v241
      %v255 = vpack.c.b16 %v244, %v243
      %v256 = vpack.c.b16 %v246, %v245
      %v257 = vpack.c.b16 %v248, %v247
      %v258 = vpack.c.b16 %v250, %v249
      %v265 = vunpack.c.l.b16 %v213
      %v266 = vunpack.c.l.b16 %v214
      %v267 = vunpack.c.l.b16 %v215
      %v268 = vunpack.c.l.b16 %v216
      %v269 = vunpack.c.l.b16 %v217
      %v270 = vunpack.c.l.b16 %v218
      %v271 = vpack.c.b16 %v266, %v265
      %v272 = vpack.c.b16 %v268, %v267
      %v273 = vpack.c.b16 %v270, %v269
      %vm277 = vcmask 392192
      %v279 = vsel %vm277, %v251, 0
      %v282 = vsel %vm277, %v252, 0
      %v285 = vsel %vm277, %v253, 0
      %v288 = vsel %vm277, %v254, 0
      %v291 = vsel %vm277, %v255, 0
      %v294 = vsel %vm277, %v256, 0
      %v297 = vsel %vm277, %v257, 0
      %v300 = vsel %vm277, %v258, 0
      %302 = vmatprep.subr.bf16.mxu0 0
      %303 = vmatpush1.bf16.msra.mxu0 %v271
      %304 = vmatprep.subr.bf16.mxu0 0
      %305 = vmatpush1.bf16.msra.mxu0 %v272
      %306 = vmatprep.subr.bf16.mxu0 0
      %307 = vmatpush1.bf16.msra.mxu0 %v273
      %308 = vmatprep.subr.bf16.mxu0 0
      %309 = vmatpush1.bf16.msra.mxu0 0
      %310 = vmatprep.subr.bf16.mxu0 0
      %311 = vmatpush1.bf16.msra.mxu0 0
      %312 = vmatprep.subr.bf16.mxu0 0
      %313 = vmatpush1.bf16.msra.mxu0 0
      %314 = vmatprep.subr.bf16.mxu0 0
      %315 = vmatpush1.bf16.msra.mxu0 0
      %316 = vmatprep.subr.bf16.mxu0 0
      %317 = vmatpush1.bf16.msra.mxu0 0
      %318 = vmatprep.subr.bf16.mxu0 0
      %319 = vmatpush1.bf16.msra.mxu0 0
      %320 = vmatprep.subr.bf16.mxu0 0
      %321 = vmatpush1.bf16.msra.mxu0 0
      %322 = vmatprep.subr.bf16.mxu0 0
      %323 = vmatpush1.bf16.msra.mxu0 0
      %324 = vmatprep.subr.bf16.mxu0 0
      %325 = vmatpush1.bf16.msra.mxu0 0
      %326 = vmatprep.subr.bf16.mxu0 0
      %327 = vmatpush1.bf16.msra.mxu0 0
      %328 = vmatprep.subr.bf16.mxu0 0
      %329 = vmatpush1.bf16.msra.mxu0 0
      %330 = vmatprep.subr.bf16.mxu0 0
      %331 = vmatpush1.bf16.msra.mxu0 0
      %332 = vmatprep.subr.bf16.mxu0 0
      %333 = vmatpush1.bf16.msra.mxu0 0
      %334 = vmatprep.mubr.bf16.mxu0 0
      %335 = vmatmul.mubr.bf16.gmra.mrb[0].mxu0 %v279
      %v336 = vpop.f32.mrb[0].mxu0
      %v337 = vadd.f32 0.0, %v336
      %v338 = vpop.f32.mrb[0].mxu0
      %v339 = vpop.f32.mrb[0].mxu0
      %v340 = vadd.f32 0.0, %v339
      %v341 = vpop.f32.mrb[0].mxu0
      %342 = vmatprep.mubr.bf16.mxu0 0
      %343 = vmatmul.mubr.bf16.gmra.mrb[0].mxu0 %v282
      %v344 = vpop.f32.mrb[0].mxu0
      %v345 = vadd.f32 0.0, %v344
      %v346 = vpop.f32.mrb[0].mxu0
      %v347 = vpop.f32.mrb[0].mxu0
      %v348 = vadd.f32 0.0, %v347
      %v349 = vpop.f32.mrb[0].mxu0
      %350 = vmatprep.mubr.bf16.mxu0 0
      %351 = vmatmul.mubr.bf16.gmra.mrb[0].mxu0 %v285
      %v352 = vpop.f32.mrb[0].mxu0
      %v353 = vadd.f32 0.0, %v352
      %v354 = vpop.f32.mrb[0].mxu0
      %v355 = vpop.f32.mrb[0].mxu0
      %v356 = vadd.f32 0.0, %v355
      %v357 = vpop.f32.mrb[0].mxu0
      %358 = vmatprep.mubr.bf16.mxu0 0
      %359 = vmatmul.mubr.bf16.gmra.mrb[0].mxu0 %v288
      %v360 = vpop.f32.mrb[0].mxu0
      %v361 = vadd.f32 0.0, %v360
      %v362 = vpop.f32.mrb[0].mxu0
      %v363 = vpop.f32.mrb[0].mxu0
      %v364 = vadd.f32 0.0, %v363
      %v365 = vpop.f32.mrb[0].mxu0
      %366 = vmatprep.mubr.bf16.mxu0 0
      %367 = vmatmul.mubr.bf16.gmra.mrb[0].mxu0 %v291
      %v368 = vpop.f32.mrb[0].mxu0
      %v369 = vadd.f32 0.0, %v368
      %v370 = vpop.f32.mrb[0].mxu0
      %v371 = vpop.f32.mrb[0].mxu0
      %v372 = vadd.f32 0.0, %v371
      %v373 = vpop.f32.mrb[0].mxu0
      %374 = vmatprep.mubr.bf16.mxu0 0
      %375 = vmatmul.mubr.bf16.gmra.mrb[0].mxu0 %v294
      %v376 = vpop.f32.mrb[0].mxu0
      %v377 = vadd.f32 0.0, %v376
      %v378 = vpop.f32.mrb[0].mxu0
      %v379 = vpop.f32.mrb[0].mxu0
      %v380 = vadd.f32 0.0, %v379
      %v381 = vpop.f32.mrb[0].mxu0
      %382 = vmatprep.mubr.bf16.mxu0 0
      %383 = vmatmul.mubr.bf16.gmra.mrb[0].mxu0 %v297
      %v384 = vpop.f32.mrb[0].mxu0
      %v385 = vadd.f32 0.0, %v384
      %v386 = vpop.f32.mrb[0].mxu0
      %v387 = vpop.f32.mrb[0].mxu0
      %v388 = vadd.f32 0.0, %v387
      %v389 = vpop.f32.mrb[0].mxu0
      %390 = vmatprep.mubr.bf16.mxu0 0
      %391 = vmatmul.mubr.bf16.gmra.mrb[0].mxu0 %v300
      %v392 = vpop.f32.mrb[0].mxu0
      %v393 = vadd.f32 0.0, %v392
      %v394 = vpop.f32.mrb[0].mxu0
      %v395 = vpop.f32.mrb[0].mxu0
      %v396 = vadd.f32 0.0, %v395
      %v397 = vpop.f32.mrb[0].mxu0
      %398 = vdwg.mxu0
      %399 = vst [vmem:[%s194] sm:$0xff] %v337
      %400 = vst [vmem:[%s194 + $0x8] sm:$0xff] %v340
      %401 = vst [vmem:[%s194 + $0x10] sm:$0xff] %v345
      %402 = vst [vmem:[%s194 + $0x18] sm:$0xff] %v348
      %403 = vst [vmem:[%s194 + $0x20] sm:$0xff] %v353
      %404 = vst [vmem:[%s194 + $0x28] sm:$0xff] %v356
      %405 = vst [vmem:[%s194 + $0x30] sm:$0xff] %v361
      %406 = vst [vmem:[%s194 + $0x38] sm:$0xff] %v364
      %407 = vst [vmem:[%s194 + $0x40] sm:$0xff] %v369
      %408 = vst [vmem:[%s194 + $0x48] sm:$0xff] %v372
      %409 = vst [vmem:[%s194 + $0x50] sm:$0xff] %v377
      %410 = vst [vmem:[%s194 + $0x58] sm:$0xff] %v380
      %411 = vst [vmem:[%s194 + $0x60] sm:$0xff] %v385
      %412 = vst [vmem:[%s194 + $0x68] sm:$0xff] %v388
      %413 = vst [vmem:[%s194 + $0x70] sm:$0xff] %v393
      %414 = vst [vmem:[%s194 + $0x78] sm:$0xff] %v396
      %v415 = vadd.f32 %v337, %v340
      %v416 = vadd.f32 %v415, %v345
      %v417 = vadd.f32 %v416, %v348
      %v418 = vadd.f32 %v417, %v353
      %v419 = vadd.f32 %v418, %v356
      %v420 = vadd.f32 %v419, %v361
      %v421 = vadd.f32 %v420, %v364
      %v422 = vadd.f32 %v421, %v369
      %v423 = vadd.f32 %v422, %v372
      %v424 = vadd.f32 %v423, %v377
      %v425 = vadd.f32 %v424, %v380
      %v426 = vadd.f32 %v425, %v385
      %v427 = vadd.f32 %v426, %v388
      %v428 = vadd.f32 %v427, %v393
      %v429 = vadd.f32 %v428, %v396
      %v430 = vrot.slane %v429, 4
      %v431 = vadd.f32 %v429, %v430
      %v432 = vrot.slane %v431, 2
      %v433 = vadd.f32 %v431, %v432
      %v434 = vrot.slane %v433, 1
      %v435 = vadd.f32 %v433, %v434
      %v436 = vmul.f32 %v337, %v337
      %v437 = vmul.f32 %v340, %v340
      %v438 = vmul.f32 %v345, %v345
      %v439 = vmul.f32 %v348, %v348
      %v440 = vmul.f32 %v353, %v353
      %v441 = vmul.f32 %v356, %v356
      %v442 = vmul.f32 %v361, %v361
      %v443 = vmul.f32 %v364, %v364
      %v444 = vmul.f32 %v369, %v369
      %v445 = vmul.f32 %v372, %v372
      %v446 = vmul.f32 %v377, %v377
      %v447 = vmul.f32 %v380, %v380
      %v448 = vmul.f32 %v385, %v385
      %v449 = vmul.f32 %v388, %v388
      %v450 = vmul.f32 %v393, %v393
      %v451 = vmul.f32 %v396, %v396
      %v452 = vadd.f32 %v436, %v437
      %v453 = vadd.f32 %v452, %v438
      %v454 = vadd.f32 %v453, %v439
      %v455 = vadd.f32 %v454, %v440
      %v456 = vadd.f32 %v455, %v441
      %v457 = vadd.f32 %v456, %v442
      %v458 = vadd.f32 %v457, %v443
      %v459 = vadd.f32 %v458, %v444
      %v460 = vadd.f32 %v459, %v445
      %v461 = vadd.f32 %v460, %v446
      %v462 = vadd.f32 %v461, %v447
      %v463 = vadd.f32 %v462, %v448
      %v464 = vadd.f32 %v463, %v449
      %v465 = vadd.f32 %v464, %v450
      %v466 = vadd.f32 %v465, %v451
      %v467 = vrot.slane %v466, 4
      %v468 = vadd.f32 %v466, %v467
      %v469 = vrot.slane %v468, 2
      %v470 = vadd.f32 %v468, %v469
      %v471 = vrot.slane %v470, 1
      %v472 = vadd.f32 %v470, %v471
      %p473 = scmp.eq.s32.totalorder %s16, 0
      // Predicated region
      $region29: #{bn_conv2d_relu.2} parent=27 // pred_check
        %p474 = pneg %p473
      $region30: #{bn_conv2d_relu.2} parent=27 // pred_check_branch
        %476 = sbr.rel (%p474) target = $region32
      $region31: #{bn_conv2d_relu.2} parent=27 // pred_region
        %477 = vst [vmem:[%s3] sm:$0x1] %v435
        %478 = vst [vmem:[%s4] sm:$0x1] %v472
      $region32: #{bn_conv2d_relu.2} parent=27 // pred_fallthru
        _
      %p479 = scmp.gt.s32.totalorder %s16, 0
      // Predicated region
      $region33: #{bn_conv2d_relu.2} parent=27 // pred_check
        %p480 = pneg %p479
      $region34: #{bn_conv2d_relu.2} parent=27 // pred_check_branch
        %482 = sbr.rel (%p480) target = $region36
      $region35: #{bn_conv2d_relu.2} parent=27 // pred_region
        %v483 = vld [vmem:[%s3] sm:$0x1]
        %v484 = vadd.f32 %v483, %v435
        %485 = vst [vmem:[%s3] sm:$0x1] %v484
        %v486 = vld [vmem:[%s4] sm:$0x1]
        %v487 = vadd.f32 %v486, %v472
        %488 = vst [vmem:[%s4] sm:$0x1] %v487
      $region36: #{bn_conv2d_relu.2} parent=27 // pred_fallthru
        _
      %s489 = smul.u32 16, %s16
      %p490 = scmp.lt.s32.totalorder %s489, 63
      %s491 = scalar_select %p490, %s489, 63
      %s492 = smul.addr %s491, 8
      %s493 = scalar_lea.vmem %s2, %s492
      // Predicated region
      $region37: #{bn_conv2d_relu.2} parent=27 // pred_check
        %p494 = pneg %p81
      $region38: #{bn_conv2d_relu.2} parent=27 // pred_check_branch
        %496 = sbr.rel (%p494) target = $region40
      $region39: #{bn_conv2d_relu.2} parent=27 // pred_region
        %s497 = smul.u32 16, %s16
      $region40: #{bn_conv2d_relu.2} parent=27 // pred_fallthru
        _
      // Predicated region
      $region41: #{bn_conv2d_relu.2} parent=27 // pred_check
        %p498 = pneg %p102
      $region42: #{bn_conv2d_relu.2} parent=27 // pred_check_branch
        %500 = sbr.rel (%p498) target = $region44
      $region43: #{bn_conv2d_relu.2} parent=27 // pred_region
        _
      $region44: #{bn_conv2d_relu.2} parent=27 // pred_fallthru
        _
      // Predicated region
      $region45: #{bn_conv2d_relu.2} parent=27 // pred_check
        %p501 = pneg %p123
      $region46: #{bn_conv2d_relu.2} parent=27 // pred_check_branch
        %503 = sbr.rel (%p501) target = $region48
      $region47: #{bn_conv2d_relu.2} parent=27 // pred_region
        _
      $region48: #{bn_conv2d_relu.2} parent=27 // pred_fallthru
        _
      // Predicated region
      $region49: #{bn_conv2d_relu.2} parent=27 // pred_check
        %p504 = pneg %p102
      $region50: #{bn_conv2d_relu.2} parent=27 // pred_check_branch
        %506 = sbr.rel (%p504) target = $region52
      $region51: #{bn_conv2d_relu.2} parent=27 // pred_region
        _
      $region52: #{bn_conv2d_relu.2} parent=27 // pred_fallthru
        _
      // Predicated region
      $region53: #{bn_conv2d_relu.2} parent=27 // pred_check
        %p507 = pneg %p123
      $region54: #{bn_conv2d_relu.2} parent=27 // pred_check_branch
        %509 = sbr.rel (%p507) target = $region56
      $region55: #{bn_conv2d_relu.2} parent=27 // pred_region
        _
      $region56: #{bn_conv2d_relu.2} parent=27 // pred_fallthru
        _
    $region28: #{bn_conv2d_relu.2} parent=5 // pred_fallthru
      _
    %p510 = scmp.le.s32.totalorder 2, %s11
    // Predicated region
    $region57: #{bn_conv2d_relu.2} parent=5 // pred_check
      %p511 = pneg %p510
    $region58: #{bn_conv2d_relu.2} parent=5 // pred_check_branch
      %513 = sbr.rel (%p511) target = $region60
    $region59: #{bn_conv2d_relu.2} parent=5 // pred_region
      %s514 = ssub.s32 %s11, 2
      // Predicated region
      $region61: #{bn_conv2d_relu.2} parent=59 // pred_check
        %p515 = pneg %p87
      $region62: #{bn_conv2d_relu.2} parent=59 // pred_check_branch
        %517 = sbr.rel (%p515) target = $region64
      $region63: #{bn_conv2d_relu.2} parent=59 // pred_region
        %s518 = smul.u32 16, %s17
        %p519 = scmp.lt.s32.totalorder %s518, 63
        %s520 = scalar_select %p519, %s518, 63
        %s521 = smul.addr %s520, 8
        %s522 = scalar_lea.vmem %s2, %s521
      $region64: #{bn_conv2d_relu.2} parent=59 // pred_fallthru
        _
    $region60: #{bn_conv2d_relu.2} parent=5 // pred_fallthru
      _
  $region6: #{bn_conv2d_relu.2} parent=0 // loop_footer
    %s15 = sadd.s32 1, %s11
  $region7: #{bn_conv2d_relu.2} parent=0 // loop_footer_branch
    %10 = sbr.rel target = $region3
  $region8: #{bn_conv2d_relu.2} parent=0 // loop_exit
    _

</llo_original>
